<compile_context>
chip_gen: v5e
topology: v5e:2x2
jax: 0.10.0
libtpu: 0.0.40
codegen_flags: <defaults>
</compile_context>

<pallas_src>
import functools

import jax
import jax.numpy as jnp
from jax.experimental import pallas as pl
from jax.experimental.pallas import tpu as pltpu


def _ce_kernel(logits_ref, target_ref, out_ref, *, ignore_index):
    # Native-dtype load: no full-size f32 copy of the block is bound.
    logits = logits_ref[...]                                   # (TN, C)
    tgt = target_ref[...]                                      # (TN, 1) int32

    # Row max in the native dtype (exact), promoted per-row scalar only.
    m_f32 = jnp.max(logits, axis=-1, keepdims=True).astype(jnp.float32)

    # exp-sum pass: the f32 cast and subtraction fuse into the exp stream.
    sum_exp = jnp.sum(jnp.exp(logits.astype(jnp.float32) - m_f32),
                      axis=-1, keepdims=True)                  # (TN, 1)

    # Target-logit gather straight from the raw logits via one-hot compare.
    # Exact in any dtype: exactly one non-zero per row, the rest are zeros.
    cls_idx = jax.lax.broadcasted_iota(jnp.int32, logits.shape, 1)
    tgt_logit = jnp.sum(jnp.where(cls_idx == tgt, logits, 0),
                        axis=-1, keepdims=True).astype(jnp.float32)

    # nll = logsumexp - target_logit = log(sum_exp) + m - target_logit
    nll = jnp.log(sum_exp) + m_f32 - tgt_logit                 # (TN, 1)

    # Mask ignored rows AND the garbage tail rows of the last block (their
    # logits were read past the array edge; they are safe only because the
    # wrapper pads their target to ignore_index).
    valid = tgt != ignore_index                                # (TN, 1) bool
    tile_sum = jnp.sum(jnp.where(valid, nll, 0.0))
    tile_cnt = jnp.sum(valid.astype(jnp.float32))

    # Lane-dense (1, 128) partial: lane 0 = NLL sum, lane 1 = valid count.
    lane = jax.lax.broadcasted_iota(jnp.int32, (1, 128), 1)
    out_ref[0] = jnp.where(lane == 0, tile_sum,
                           jnp.where(lane == 1, tile_cnt, 0.0))


def _vmem_capacity_bytes():
    try:
        cap = getattr(pltpu.get_tpu_info(), "vmem_capacity_bytes", None)
        if cap:
            return int(cap)
    except Exception:
        pass
    return 64 * 1024 * 1024  # conservative fallback (v7x per-TC VMEM)


def cross_entropy(logits, target, weight=None, reduction="mean", *,
                  block_bytes=None, ignore_index=-100):
    """Pallas equivalent of F.cross_entropy(input, target) for 2-D logits.

    logits: (N, C) float, target: (N,) int class indices.
    Supports weight=None, reduction in ('mean', 'sum'), ignore_index=-100.
    reduction='mean' with zero valid rows returns NaN (matches PyTorch).
    """
    assert weight is None, "TODO(synk): class weights not implemented"
    assert logits.ndim == 2 and target.ndim == 1
    N, C = logits.shape

    in_bytes = jnp.dtype(logits.dtype).itemsize
    sublane = {2: 16, 1: 32}.get(in_bytes, 8)     # min sublane tile per dtype
    row_bytes = C * in_bytes

    vmem_cap = _vmem_capacity_bytes()
    if block_bytes is None:
        # Peak VMEM ~= 2x double-buffered input block + in-kernel f32 temps
        # (~3-4x block_bytes) -> cap blocks around vmem/8 per generation
        # (16 MiB on 128 MiB v5e/v6e, 8 MiB on 64 MiB v7x).
        block_bytes = min(32 << 20, max(1 << 20, vmem_cap // 8))

    # Row tile: ~block_bytes of *input-dtype* logits per grid step, rounded to
    # the sublane tile and capped at the (sublane-padded) batch size.
    tile_n = max(sublane, (block_bytes // row_bytes) // sublane * sublane)
    tile_n = min(tile_n, pl.cdiv(N, sublane) * sublane)

    # v7x: the "parallel" axis only uses both TensorCores with >= 2 grid
    # steps; split a single big tile in two when each half stays >= ~1 MiB.
    if pl.cdiv(N, tile_n) == 1 and tile_n * row_bytes >= (2 << 20):
        tile_n = pl.cdiv(pl.cdiv(N, 2), sublane) * sublane

    num_tiles = pl.cdiv(N, tile_n)
    n_pad = num_tiles * tile_n

    # Logits are NOT padded (no extra HBM round-trip); only the tiny target
    # vector is padded to ignore_index so the tail rows of the last block
    # (read past the logits edge) are masked out in-kernel.
    tgt = target.astype(jnp.int32)
    if n_pad != N:
        tgt = jnp.pad(tgt, (0, n_pad - N), constant_values=ignore_index)
    tgt2d = tgt.reshape(n_pad, 1)

    vmem_limit = int(min(vmem_cap * 3 // 4, max(48 << 20, 5 * block_bytes)))
    vmem_limit = max(vmem_limit, 32 << 20)

    kernel = functools.partial(_ce_kernel, ignore_index=ignore_index)
    partials = pl.pallas_call(
        kernel,
        out_shape=jax.ShapeDtypeStruct((num_tiles, 1, 128), jnp.float32),
        grid_spec=pltpu.PrefetchScalarGridSpec(
            num_scalar_prefetch=0,
            grid=(num_tiles,),
            in_specs=[
                pl.BlockSpec((tile_n, C), lambda i: (i, 0)),
                pl.BlockSpec((tile_n, 1), lambda i: (i, 0)),
            ],
            out_specs=pl.BlockSpec((1, 1, 128), lambda i: (i, 0, 0)),
        ),
        compiler_params=pltpu.CompilerParams(
            dimension_semantics=("parallel",),   # independent tiles -> both v7x TCs
            vmem_limit_bytes=vmem_limit,
        ),
    )(logits, tgt2d)

    total = jnp.sum(partials[:, 0, 0])
    count = jnp.sum(partials[:, 0, 1])
    if reduction == "sum":
        return total
    if reduction == "mean":
        return total / count
    raise NotImplementedError("TODO(synk): reduction='none' not implemented")


def _reference_ce(logits, target, ignore_index=-100):
    logits = logits.astype(jnp.float32)
    valid = target != ignore_index
    safe_t = jnp.where(valid, target, 0)
    logz = jax.scipy.special.logsumexp(logits, axis=-1)
    tgt_logit = jnp.take_along_axis(logits, safe_t[:, None], axis=-1)[:, 0]
    nll = jnp.where(valid, logz - tgt_logit, 0.0)
    return jnp.sum(nll) / jnp.sum(valid)


if __name__ == "__main__":
    key = jax.random.PRNGKey(0)
    k1, k2, k3, k4 = jax.random.split(key, 4)

    # Test 1: simple aligned case (batch=16, classes=32), all targets valid.
    N, C = 16, 32
    logits = jax.random.normal(k1, (N, C), dtype=jnp.float32)
    target = jax.random.randint(k2, (N,), 0, C, dtype=jnp.int32)
    loss = jax.block_until_ready(cross_entropy(logits, target))
    ref = jax.block_until_ready(_reference_ce(logits, target))
    assert jnp.allclose(loss, ref, atol=1e-5, rtol=1e-5), (loss, ref)

    # Test 2: ragged batch (13 rows, 2 tiles of 8 -> last block reads past the
    # logits edge) plus an ignore_index row; exercises the no-pad path.
    N2, C2 = 13, 32
    logits2 = jax.random.normal(k3, (N2, C2), dtype=jnp.float32)
    target2 = jax.random.randint(k4, (N2,), 0, C2, dtype=jnp.int32)
    target2 = target2.at[5].set(-100)
    loss2 = jax.block_until_ready(
        cross_entropy(logits2, target2, block_bytes=1024))
    ref2 = jax.block_until_ready(_reference_ce(logits2, target2))
    assert jnp.allclose(loss2, ref2, atol=1e-5, rtol=1e-5), (loss2, ref2)

    print("KERNEL_OK")
</pallas_src>

<mosaic_0001>
module attributes {stable_mosaic.version = 11 : i64} {
  func.func @_ce_kernel(%arg0: i32, %arg1: memref<16x32xf32, #tpu.memory_space<vmem>>, %arg2: memref<16x1xi32, #tpu.memory_space<vmem>>, %arg3: memref<1x1x128xf32, #tpu.memory_space<vmem>>) attributes {dimension_semantics = [#tpu.dimension_semantics<parallel>], iteration_bounds = array<i64: 1>, scalar_prefetch = 0 : i64, scratch_operands = 0 : i64, tpu.core_type = #tpu.core_type<tc>, window_params = [{transform_indices = @transform_0, window_bounds = array<i64: 16, 32>}, {transform_indices = @transform_1, window_bounds = array<i64: 16, 1>}, {transform_indices = @transform_2, window_bounds = array<i64: 1, 1, 128>}]} {
    %c0 = arith.constant 0 : index
    %c0_0 = arith.constant 0 : index
    %0 = vector.load %arg1[%c0, %c0_0] : memref<16x32xf32, #tpu.memory_space<vmem>>, vector<16x32xf32>
    %c0_1 = arith.constant 0 : index
    %c0_2 = arith.constant 0 : index
    %1 = vector.load %arg2[%c0_1, %c0_2] : memref<16x1xi32, #tpu.memory_space<vmem>>, vector<16x1xi32>
    %cst = arith.constant dense<0xFF800000> : vector<16xf32>
    %2 = vector.multi_reduction <maximumf>, %0, %cst [1] : vector<16x32xf32> to vector<16xf32>
    %3 = vector.shape_cast %2 : vector<16xf32> to vector<16x1xf32>
    %4 = vector.broadcast %3 : vector<16x1xf32> to vector<16x32xf32>
    %5 = arith.subf %0, %4 : vector<16x32xf32>
    %6 = math.exp %5 : vector<16x32xf32>
    %cst_3 = arith.constant dense<0.000000e+00> : vector<16xf32>
    %7 = vector.multi_reduction <add>, %6, %cst_3 [1] : vector<16x32xf32> to vector<16xf32>
    %8 = vector.shape_cast %7 : vector<16xf32> to vector<16x1xf32>
    %9 = tpu.iota {dimensions = array<i32: 1>} : vector<16x32xi32>
    %10 = vector.broadcast %1 : vector<16x1xi32> to vector<16x32xi32>
    %11 = arith.cmpi eq, %9, %10 : vector<16x32xi32>
    %c0_i32 = arith.constant 0 : i32
    %12 = arith.sitofp %c0_i32 : i32 to f32
    %13 = vector.broadcast %12 : f32 to vector<16x32xf32>
    %14 = arith.select %11, %0, %13 : vector<16x32xi1>, vector<16x32xf32>
    %cst_4 = arith.constant dense<0.000000e+00> : vector<16xf32>
    %15 = vector.multi_reduction <add>, %14, %cst_4 [1] : vector<16x32xf32> to vector<16xf32>
    %16 = vector.shape_cast %15 : vector<16xf32> to vector<16x1xf32>
    %17 = math.log %8 : vector<16x1xf32>
    %18 = arith.addf %17, %3 : vector<16x1xf32>
    %19 = arith.subf %18, %16 : vector<16x1xf32>
    %c-100_i32 = arith.constant -100 : i32
    %20 = vector.broadcast %c-100_i32 : i32 to vector<16x1xi32>
    %21 = arith.cmpi ne, %1, %20 : vector<16x1xi32>
    %cst_5 = arith.constant 0.000000e+00 : f32
    %22 = vector.broadcast %cst_5 : f32 to vector<16x1xf32>
    %23 = arith.select %21, %19, %22 : vector<16x1xi1>, vector<16x1xf32>
    %24 = vector.shape_cast %23 : vector<16x1xf32> to vector<1x16x1xf32>
    %cst_6 = arith.constant dense<0.000000e+00> : vector<1xf32>
    %25 = vector.multi_reduction <add>, %24, %cst_6 [1, 2] : vector<1x16x1xf32> to vector<1xf32>
    %26 = vector.shape_cast %25 : vector<1xf32> to vector<1x1x1xf32>
    %27 = vector.extract %26[0, 0, 0] : f32 from vector<1x1x1xf32>
    %28 = arith.extui %21 : vector<16x1xi1> to vector<16x1xi32>
    %29 = arith.sitofp %28 : vector<16x1xi32> to vector<16x1xf32>
    %30 = vector.shape_cast %29 : vector<16x1xf32> to vector<1x16x1xf32>
    %cst_7 = arith.constant dense<0.000000e+00> : vector<1xf32>
    %31 = vector.multi_reduction <add>, %30, %cst_7 [1, 2] : vector<1x16x1xf32> to vector<1xf32>
    %32 = vector.shape_cast %31 : vector<1xf32> to vector<1x1x1xf32>
    %33 = vector.extract %32[0, 0, 0] : f32 from vector<1x1x1xf32>
    %34 = tpu.iota {dimensions = array<i32: 1>} : vector<1x128xi32>
    %c0_i32_8 = arith.constant 0 : i32
    %35 = vector.broadcast %c0_i32_8 : i32 to vector<1x128xi32>
    %36 = arith.cmpi eq, %34, %35 : vector<1x128xi32>
    %c1_i32 = arith.constant 1 : i32
    %37 = vector.broadcast %c1_i32 : i32 to vector<1x128xi32>
    %38 = arith.cmpi eq, %34, %37 : vector<1x128xi32>
    %cst_9 = arith.constant 0.000000e+00 : f32
    %39 = vector.broadcast %33 : f32 to vector<1x128xf32>
    %40 = vector.broadcast %cst_9 : f32 to vector<1x128xf32>
    %41 = arith.select %38, %39, %40 : vector<1x128xi1>, vector<1x128xf32>
    %42 = vector.broadcast %27 : f32 to vector<1x128xf32>
    %43 = arith.select %36, %42, %41 : vector<1x128xi1>, vector<1x128xf32>
    %c0_10 = arith.constant 0 : index
    %c0_11 = arith.constant 0 : index
    %c0_12 = arith.constant 0 : index
    %44 = vector.load %arg3[%c0_10, %c0_11, %c0_12] : memref<1x1x128xf32, #tpu.memory_space<vmem>>, vector<1x1x128xf32>
    %45 = vector.shape_cast %44 : vector<1x1x128xf32> to vector<1x128xf32>
    %46 = vector.shape_cast %43 : vector<1x128xf32> to vector<1x1x128xf32>
    tpu.vector_store %arg3[%c0_10, %c0_11, %c0_12], %46 {strides = array<i32>} : memref<1x1x128xf32, #tpu.memory_space<vmem>>, vector<1x1x128xf32>,
    return
  }
  func.func @transform_0(%arg0: i32) -> (i32, i32) {
    %c0_i32 = arith.constant 0 : i32
    %c0_i32_0 = arith.constant 0 : i32
    return %arg0, %c0_i32 : i32, i32
  }
  func.func @transform_1(%arg0: i32) -> (i32, i32) {
    %c0_i32 = arith.constant 0 : i32
    %c0_i32_0 = arith.constant 0 : i32
    return %arg0, %c0_i32 : i32, i32
  }
  func.func @transform_2(%arg0: i32) -> (i32, i32, i32) {
    %c0_i32 = arith.constant 0 : i32
    %c0_i32_0 = arith.constant 0 : i32
    %c0_i32_1 = arith.constant 0 : i32
    return %arg0, %c0_i32, %c0_i32_0 : i32, i32, i32
  }
}

</mosaic_0001>

<llo_original>
// kernel: tpu_custom_call.1
$region0: #{tpu_custom_call.1}
  #allocation0 [shape = 'u32[]', space=smem, size = 0x4, offset = 0x4, fixed_abs, tag = 'smem constant byte address 0x4 - core index']
  #allocation1 [shape = 'u32[72,128]{1,0:T(1,128)}', space=vmem, size = 0x9000, scoped, tag = 'internal scratch']
  %s0 = inlined_call_operand.vmem [shape: f32[16,32], index: 0, kind: input, shape index: {}]
  %s1 = inlined_call_operand.vmem [shape: s32[16,1], index: 1, kind: input, shape index: {}]
  %s2 = inlined_call_operand.hbm [shape: f32[1,1,128], index: 2, kind: output, shape index: {}]
  %s3 = sld [smem:[#allocation0]]
  $region18: #{tpu_custom_call.1} parent=0
    _
  %s5 = ssub.s32 1, %s3
  %s6 = scalar_select 0, %s5, %s3
  $region1: #{tpu_custom_call.1} parent=0
    #allocation2 [shape = 'u8[512]{0}', space=vmem, size = 0x400, scoped, tag = 'output window, operand 0, single buffered']
    #allocation3 [shape = 's32[1]{0}', space=sflag, size = 0x4, scoped, tag = 'scoped memory for tpu_custom_call.1']
    %7 = vsyncpa [#allocation3], 0
    // Predicated region
    $region2: #{tpu_custom_call.1} parent=1 // pred_check
      _
    $region3: #{tpu_custom_call.1} parent=1 // pred_check_branch
      %9 = sbr.rel (0) target = $region5
    $region4: #{tpu_custom_call.1} parent=1 // pred_region
      _
    $region5: #{tpu_custom_call.1} parent=1 // pred_fallthru
      _
    // Predicated region
    $region6: #{tpu_custom_call.1} parent=1 // pred_check
      _
    $region7: #{tpu_custom_call.1} parent=1 // pred_check_branch
      %11 = sbr.rel (0) target = $region9
    $region8: #{tpu_custom_call.1} parent=1 // pred_region
      _
    $region9: #{tpu_custom_call.1} parent=1 // pred_fallthru
      _
    %v12 = vld [vmem:[%s0] sm:$0xff]
    %v13 = vld [vmem:[%s0 + $0x8] sm:$0xff]
    %v14 = vld [vmem:[%s1] sm:$0xff]
    %v15 = vld [vmem:[%s1 + $0x8] sm:$0xff]
    %vm16 = vcmask 261120
    %v17 = vsel %vm16, %v12, -inf
    %18 = vmax.xlane.f32.xlu0 %v17
    %v19 = vpop.xlane.xlu0 %18
    %v20 = vsel %vm16, %v13, -inf
    %21 = vmax.xlane.f32.xlu0 %v20
    %v22 = vpop.xlane.xlu0 %21
    %v23 = vsub.f32 %v12, %v19
    %v24 = vsub.f32 %v13, %v22
    %v25 = vmul.f32 %v23, 1.442695
    %v26 = vpow.pop %v25
    %v27 = vmul.f32 %v24, 1.442695
    %v28 = vpow.pop %v27
    %v29 = vsel %vm16, %v26, 0.0
    %30 = vadd.xlane.f32.xlu0 %v29
    %v31 = vpop.xlane.xlu0 %30
    %v32 = vsel %vm16, %v28, 0.0
    %33 = vadd.xlane.f32.xlu0 %v32
    %v34 = vpop.xlane.xlu0 %33
    %v35 = vlaneseq
    %v36 = vand.u32 %v35, 127
    %37 = vset.pattern.permute.xlu0 0
    %38 = vperm.xlu0 %37, %v14
    %v39 = vpop.permute.xlu0 %38
    %40 = vset.pattern.permute.xlu0 0
    %41 = vperm.xlu0 %40, %v15
    %v42 = vpop.permute.xlu0 %41
    %vm43 = vcmp.eq.s32.totalorder %v36, %v39
    %vm44 = vcmp.eq.s32.totalorder %v36, %v42
    %v45 = vsel %vm43, %v12, 0.0
    %v46 = vsel %vm44, %v13, 0.0
    %v47 = vsel %vm16, %v45, 0.0
    %48 = vadd.xlane.f32.xlu0 %v47
    %v49 = vpop.xlane.xlu0 %48
    %v50 = vsel %vm16, %v46, 0.0
    %51 = vadd.xlane.f32.xlu0 %v50
    %v52 = vpop.xlane.xlu0 %51
    %v53 = vlog2.pop %v31
    %v54 = vmul.f32 %v53, 0.6931472
    %v55 = vlog2.pop %v34
    %v56 = vmul.f32 %v55, 0.6931472
    %v57 = vadd.f32 %v54, %v19
    %v58 = vadd.f32 %v56, %v22
    %v59 = vsub.f32 %v57, %v49
    %v60 = vsub.f32 %v58, %v52
    %vm61 = vcmp.ne.s32.totalorder %v14, 4294967196
    %vm62 = vcmp.ne.s32.totalorder %v15, 4294967196
    %v63 = vsel %vm61, %v59, 0.0
    %v64 = vsel %vm62, %v60, 0.0
    %vm65 = vcmask 7168
    %v66 = vsel %vm65, %v63, 0.0
    %v67 = vsel %vm65, %v64, 0.0
    %v68 = vadd.f32 %v66, %v67
    %69 = vadd.xlane.f32.xlu0 %v68
    %v70 = vpop.xlane.xlu0 %69
    %v71 = vrot.slane %v70, 4
    %v72 = vadd.f32 %v70, %v71
    %v73 = vrot.slane %v72, 2
    %v74 = vadd.f32 %v72, %v73
    %v75 = vrot.slane %v74, 1
    %v76 = vadd.f32 %v74, %v75
    %s77 = vtos %v76
    %v78 = vsel %vm61, 1, 0
    %v79 = vsel %vm62, 1, 0
    %v80 = vcvt.s32.f32 %v78
    %v81 = vcvt.s32.f32 %v79
    %v82 = vsel %vm65, %v80, 0.0
    %v83 = vsel %vm65, %v81, 0.0
    %v84 = vadd.f32 %v82, %v83
    %85 = vadd.xlane.f32.xlu0 %v84
    %v86 = vpop.xlane.xlu0 %85
    %v87 = vrot.slane %v86, 4
    %v88 = vadd.f32 %v86, %v87
    %v89 = vrot.slane %v88, 2
    %v90 = vadd.f32 %v88, %v89
    %v91 = vrot.slane %v90, 1
    %v92 = vadd.f32 %v90, %v91
    %s93 = vtos %v92
    %vm94 = vcmp.eq.s32.totalorder %v36, 0
    %vm95 = vcmp.eq.s32.totalorder %v36, 1
    %v96 = vstv %s93
    %v97 = vsel %vm95, %v96, 0.0
    %v98 = vstv %s77
    %v99 = vsel %vm94, %v98, %v97
    %100 = vst [vmem:[#allocation2] sm:$0x1] %v99
    // Predicated region
    $region10: #{tpu_custom_call.1} parent=1 // pred_check
      _
    $region11: #{tpu_custom_call.1} parent=1 // pred_check_branch
      %102 = sbr.rel (0) target = $region13
    $region12: #{tpu_custom_call.1} parent=1 // pred_region
      %104 = vsyncadd [#allocation3], 0
      %s106 = sshll.u32 [#allocation2], 4
      %s107 = int_to_ptr.vmem [resolvable:$true] %s106
      %s108 = sshll.u32 %s2, 4
      %s109 = int_to_ptr.hbm [resolvable:$true] %s108
      %111 = dma.vmem_to_hbm [thread:$0]  %s107, 16, %s109, [#allocation3]
    $region13: #{tpu_custom_call.1} parent=1 // pred_fallthru
      _
    // Predicated region
    $region14: #{tpu_custom_call.1} parent=1 // pred_check
      _
    $region15: #{tpu_custom_call.1} parent=1 // pred_check_branch
      %113 = sbr.rel (0) target = $region17
    $region16: #{tpu_custom_call.1} parent=1 // pred_region
      %115 = dma.done [#allocation3], 16
    $region17: #{tpu_custom_call.1} parent=1 // pred_fallthru
      _
    %116 = vsyncpa [#allocation3], 1

</llo_original>
